<compile_context>
chip_gen: v7x
topology: tpu7x:2x2x1
jax: 0.10.0
libtpu: 0.0.40
codegen_flags: <defaults>
</compile_context>

<pallas_src>
import jax
import jax.numpy as jnp
from jax.experimental import pallas as pl
from jax.experimental.pallas import tpu as pltpu


P_INPUT = 0.1     # input_dropout
P_TIMING = 0.1    # timing_dropout

# keep an element iff its uniform uint32 draw >= round(p * 2^32)  =>  P(keep) = 1 - p
_X_THRESH = int(round(P_INPUT * 2**32))
_T_THRESH = int(round(P_TIMING * 2**32))
_X_SCALE = 1.0 / (1.0 - P_INPUT)
_T_SCALE = 1.0 / (1.0 - P_TIMING)


def add_pos_enc_kernel(x_ref, xbits_ref, timing_ref, tbits_ref, o_ref, timing_vmem):
    """Grid = (seq_tiles, batch_tiles); batch is the inner ('arbitrary') axis."""

    # --- timing dropout (shared across the batch): compute once per seq tile ---
    # The inner batch axis restarts at 0 whenever the seq tile changes, so this
    # guard re-initializes the persistent scratch exactly once per seq tile
    # (and per TensorCore under megacore sharding of the seq axis).
    @pl.when(pl.program_id(1) == 0)
    def _():
        keep_t = tbits_ref[...] >= jnp.uint32(_T_THRESH)
        timing_vmem[...] = jnp.where(
            keep_t, timing_ref[...] * jnp.float32(_T_SCALE), jnp.float32(0.0)
        )

    # --- input dropout (independent per element) + broadcasted add ---
    keep_x = xbits_ref[...] >= jnp.uint32(_X_THRESH)
    x_dropped = jnp.where(
        keep_x, x_ref[...] * jnp.float32(_X_SCALE), jnp.float32(0.0)
    )
    o_ref[...] = x_dropped + timing_vmem[...]          # (TB,TS,D) + (TS,D) broadcast


def _dropout_bits(key, B, S, D):
    """Uniform uint32 bits for both dropout masks (shared timing mask is (S, D))."""
    kx, kt = jax.random.split(key)
    x_bits = jax.random.bits(kx, (B, S, D), dtype=jnp.uint32)
    t_bits = jax.random.bits(kt, (S, D), dtype=jnp.uint32)
    return x_bits, t_bits


def _pick_tiles(B, S, D, target_elems=256 * 1024):
    """~1 MiB f32 blocks: 6*Bx + 5*Bt of VMEM stays well under the 16 MiB
    v5e scoped default and far under v7x's 64 MiB physical VMEM."""
    if S * D <= target_elems:
        ts = S
    else:
        ts = min(S, max(8, (target_elems // D) // 8 * 8))   # multiple of 8 (f32 sublane)
    tb = min(B, max(1, target_elems // (ts * D)))
    return tb, ts


def add_positional_encoding(x, timing_table, key):
    """x: (B, S, D) f32; timing_table: (max_len, D) f32; key: jax PRNG key."""
    B, S, D = x.shape
    timing = timing_table[:S, :]                       # glue: slice to seq len
    x_bits, t_bits = _dropout_bits(key, B, S, D)

    TB, TS = _pick_tiles(B, S, D)
    grid = (pl.cdiv(S, TS), pl.cdiv(B, TB))            # (seq tiles, batch tiles)

    return pl.pallas_call(
        add_pos_enc_kernel,
        out_shape=jax.ShapeDtypeStruct((B, S, D), x.dtype),
        grid=grid,
        in_specs=[
            pl.BlockSpec((TB, TS, D), lambda s, b: (b, s, 0)),   # x
            pl.BlockSpec((TB, TS, D), lambda s, b: (b, s, 0)),   # x dropout bits
            pl.BlockSpec((TS, D), lambda s, b: (s, 0)),          # timing rows
            pl.BlockSpec((TS, D), lambda s, b: (s, 0)),          # timing dropout bits
        ],
        out_specs=pl.BlockSpec((TB, TS, D), lambda s, b: (b, s, 0)),
        scratch_shapes=[pltpu.VMEM((TS, D), jnp.float32)],       # persistent dropped timing
        compiler_params=pltpu.CompilerParams(
            # seq tiles are independent -> shard across TensorCores (v7x megacore);
            # batch is the inner sequential axis so the timing-scratch hoist is valid.
            dimension_semantics=("parallel", "arbitrary"),
        ),
    )(x, x_bits, timing, t_bits)


if __name__ == "__main__":
    # Small shapes consistent with the module: batch=2, seq=8, d_model=256, max_len=512
    B, S, D, MAX_LEN = 2, 8, 256, 512

    key = jax.random.PRNGKey(0)
    kx, kt, kd = jax.random.split(key, 3)
    x = jax.random.normal(kx, (B, S, D), dtype=jnp.float32)
    timing_table = jax.random.normal(kt, (MAX_LEN, D), dtype=jnp.float32)  # nn.init.normal_

    out = jax.block_until_ready(add_positional_encoding(x, timing_table, kd))

    assert out.shape == (B, S, D) and out.dtype == jnp.float32
    assert bool(jnp.all(jnp.isfinite(out)))

    # Pure-JAX reference using the identical bits / thresholds.
    xb, tb = _dropout_bits(kd, B, S, D)
    x_exp = jnp.where(xb >= jnp.uint32(_X_THRESH), x * jnp.float32(_X_SCALE), 0.0)
    t_exp = jnp.where(tb >= jnp.uint32(_T_THRESH),
                      timing_table[:S, :] * jnp.float32(_T_SCALE), 0.0)
    expected = x_exp + t_exp[None, :, :]
    assert bool(jnp.allclose(out, expected, atol=1e-5, rtol=1e-5))

    print("KERNEL_OK")
</pallas_src>

<mosaic_0001>
module attributes {stable_mosaic.version = 11 : i64} {
  func.func @add_pos_enc_kernel(%arg0: i32, %arg1: i32, %arg2: memref<2x8x256xf32, #tpu.memory_space<vmem>>, %arg3: memref<2x8x256xi32, #tpu.memory_space<vmem>>, %arg4: memref<8x256xf32, #tpu.memory_space<vmem>>, %arg5: memref<8x256xi32, #tpu.memory_space<vmem>>, %arg6: memref<2x8x256xf32, #tpu.memory_space<vmem>>, %arg7: memref<8x256xf32, #tpu.memory_space<vmem>>) attributes {dimension_semantics = [#tpu.dimension_semantics<parallel>, #tpu.dimension_semantics<arbitrary>], iteration_bounds = array<i64: 1, 1>, scalar_prefetch = 0 : i64, scratch_operands = 1 : i64, tpu.core_type = #tpu.core_type<tc>, window_params = [{transform_indices = @transform_0, window_bounds = array<i64: 2, 8, 256>}, {transform_indices = @transform_1, window_bounds = array<i64: 2, 8, 256>}, {transform_indices = @transform_2, window_bounds = array<i64: 8, 256>}, {transform_indices = @transform_3, window_bounds = array<i64: 8, 256>}, {transform_indices = @transform_4, window_bounds = array<i64: 2, 8, 256>}]} {
    %c0_i32 = arith.constant 0 : i32
    %0 = arith.cmpi eq, %arg1, %c0_i32 : i32
    %1 = arith.extui %0 : i1 to i32
    %c0_i32_0 = arith.constant 0 : i32
    %2 = arith.cmpi ne, %1, %c0_i32_0 : i32
    scf.if %2 {
      %c0_12 = arith.constant 0 : index
      %c0_13 = arith.constant 0 : index
      %16 = vector.load %arg5[%c0_12, %c0_13] : memref<8x256xi32, #tpu.memory_space<vmem>>, vector<8x256xi32>
      %c429496730_i32_14 = arith.constant 429496730 : i32
      %17 = vector.broadcast %c429496730_i32_14 : i32 to vector<8x256xi32>
      %18 = arith.cmpi uge, %16, %17 : vector<8x256xi32>
      %c0_15 = arith.constant 0 : index
      %c0_16 = arith.constant 0 : index
      %19 = vector.load %arg4[%c0_15, %c0_16] : memref<8x256xf32, #tpu.memory_space<vmem>>, vector<8x256xf32>
      %cst_17 = arith.constant 1.11111116 : f32
      %20 = vector.broadcast %cst_17 : f32 to vector<8x256xf32>
      %21 = arith.mulf %19, %20 : vector<8x256xf32>
      %cst_18 = arith.constant 0.000000e+00 : f32
      %22 = vector.broadcast %cst_18 : f32 to vector<8x256xf32>
      %23 = arith.select %18, %21, %22 : vector<8x256xi1>, vector<8x256xf32>
      %c0_19 = arith.constant 0 : index
      %c0_20 = arith.constant 0 : index
      %24 = vector.load %arg7[%c0_19, %c0_20] : memref<8x256xf32, #tpu.memory_space<vmem>>, vector<8x256xf32>
      tpu.vector_store %arg7[%c0_19, %c0_20], %23 {strides = array<i32>} : memref<8x256xf32, #tpu.memory_space<vmem>>, vector<8x256xf32>,
    } else {
    }
    %c0 = arith.constant 0 : index
    %c0_1 = arith.constant 0 : index
    %c0_2 = arith.constant 0 : index
    %3 = vector.load %arg3[%c0, %c0_1, %c0_2] : memref<2x8x256xi32, #tpu.memory_space<vmem>>, vector<2x8x256xi32>
    %c429496730_i32 = arith.constant 429496730 : i32
    %4 = vector.broadcast %c429496730_i32 : i32 to vector<2x8x256xi32>
    %5 = arith.cmpi uge, %3, %4 : vector<2x8x256xi32>
    %c0_3 = arith.constant 0 : index
    %c0_4 = arith.constant 0 : index
    %c0_5 = arith.constant 0 : index
    %6 = vector.load %arg2[%c0_3, %c0_4, %c0_5] : memref<2x8x256xf32, #tpu.memory_space<vmem>>, vector<2x8x256xf32>
    %cst = arith.constant 1.11111116 : f32
    %7 = vector.broadcast %cst : f32 to vector<2x8x256xf32>
    %8 = arith.mulf %6, %7 : vector<2x8x256xf32>
    %cst_6 = arith.constant 0.000000e+00 : f32
    %9 = vector.broadcast %cst_6 : f32 to vector<2x8x256xf32>
    %10 = arith.select %5, %8, %9 : vector<2x8x256xi1>, vector<2x8x256xf32>
    %c0_7 = arith.constant 0 : index
    %c0_8 = arith.constant 0 : index
    %11 = vector.load %arg7[%c0_7, %c0_8] : memref<8x256xf32, #tpu.memory_space<vmem>>, vector<8x256xf32>
    %12 = vector.shape_cast %11 : vector<8x256xf32> to vector<1x8x256xf32>
    %13 = vector.broadcast %12 : vector<1x8x256xf32> to vector<2x8x256xf32>
    %14 = arith.addf %10, %13 : vector<2x8x256xf32>
    %c0_9 = arith.constant 0 : index
    %c0_10 = arith.constant 0 : index
    %c0_11 = arith.constant 0 : index
    %15 = vector.load %arg6[%c0_9, %c0_10, %c0_11] : memref<2x8x256xf32, #tpu.memory_space<vmem>>, vector<2x8x256xf32>
    tpu.vector_store %arg6[%c0_9, %c0_10, %c0_11], %14 {strides = array<i32>} : memref<2x8x256xf32, #tpu.memory_space<vmem>>, vector<2x8x256xf32>,
    return
  }
  func.func @transform_0(%arg0: i32, %arg1: i32) -> (i32, i32, i32) {
    %c0_i32 = arith.constant 0 : i32
    %c0_i32_0 = arith.constant 0 : i32
    return %arg1, %arg0, %c0_i32 : i32, i32, i32
  }
  func.func @transform_1(%arg0: i32, %arg1: i32) -> (i32, i32, i32) {
    %c0_i32 = arith.constant 0 : i32
    %c0_i32_0 = arith.constant 0 : i32
    return %arg1, %arg0, %c0_i32 : i32, i32, i32
  }
  func.func @transform_2(%arg0: i32, %arg1: i32) -> (i32, i32) {
    %c0_i32 = arith.constant 0 : i32
    %c0_i32_0 = arith.constant 0 : i32
    return %arg0, %c0_i32 : i32, i32
  }
  func.func @transform_3(%arg0: i32, %arg1: i32) -> (i32, i32) {
    %c0_i32 = arith.constant 0 : i32
    %c0_i32_0 = arith.constant 0 : i32
    return %arg0, %c0_i32 : i32, i32
  }
  func.func @transform_4(%arg0: i32, %arg1: i32) -> (i32, i32, i32) {
    %c0_i32 = arith.constant 0 : i32
    %c0_i32_0 = arith.constant 0 : i32
    return %arg1, %arg0, %c0_i32 : i32, i32, i32
  }
}

</mosaic_0001>

<llo_original>
// kernel: tpu_custom_call.1
$region0: #{tpu_custom_call.1}
  #allocation0 [shape = 'u32[]', space=smem, size = 0x4, offset = 0x4, fixed_abs, tag = 'smem constant byte address 0x4 - core index']
  #allocation1 [shape = 'u32[144,128]{1,0:T(1,128)}', space=vmem, size = 0x12000, scoped, tag = 'internal scratch']
  #allocation2 [shape = 'f32[8,256]{1,0:T(8,128)}', space=vmem, size = 0x2000, scoped, tag = 'scratch operand']
  %s0 = inlined_call_operand.hbm [shape: f32[2,8,256], index: 0, kind: input, shape index: {}]
  %s1 = inlined_call_operand.hbm [shape: u32[2,8,256], index: 1, kind: input, shape index: {}]
  %s2 = inlined_call_operand.hbm [shape: f32[8,256], index: 2, kind: input, shape index: {}]
  %s3 = inlined_call_operand.hbm [shape: u32[8,256], index: 3, kind: input, shape index: {}]
  %s4 = inlined_call_operand.hbm [shape: f32[2,8,256], index: 4, kind: output, shape index: {}]
  %s5 = sld [smem:[#allocation0]]
  $region46: #{tpu_custom_call.1} parent=0
    _
  %s7 = ssub.s32 1, %s5
  %s8 = scalar_select 0, %s7, %s5
  $region1: #{tpu_custom_call.1} parent=0
    #allocation3 [shape = 'u8[16384]{0}', space=vmem, size = 0x4000, scoped, tag = 'input window, operand 0, single buffered']
    #allocation4 [shape = 's32[1]{0}', space=sflag, size = 0x4, scoped, tag = 'scoped memory for tpu_custom_call.1']
    #allocation5 [shape = 's32[1]{0}', space=sflag, size = 0x4, scoped, tag = 'scoped memory for tpu_custom_call.1']
    #allocation6 [shape = 'u8[16384]{0}', space=vmem, size = 0x4000, scoped, tag = 'input window, operand 1, single buffered']
    #allocation7 [shape = 's32[1]{0}', space=sflag, size = 0x4, scoped, tag = 'scoped memory for tpu_custom_call.1']
    #allocation8 [shape = 'u8[8192]{0}', space=vmem, size = 0x2000, scoped, tag = 'input window, operand 2, single buffered']
    #allocation9 [shape = 'u8[8192]{0}', space=vmem, size = 0x2000, scoped, tag = 'input window, operand 3, single buffered']
    #allocation10 [shape = 's32[1]{0}', space=sflag, size = 0x4, scoped, tag = 'scoped memory for tpu_custom_call.1']
    #allocation11 [shape = 'u8[16384]{0}', space=vmem, size = 0x4000, scoped, tag = 'output window, operand 0, single buffered']
    %9 = vsyncpa [#allocation4], 0
    %10 = vsyncpa [#allocation7], 0
    %11 = vsyncpa [#allocation10], 0
    %12 = vsyncpa [#allocation5], 0
    // Predicated region
    $region2: #{tpu_custom_call.1} parent=1 // pred_check
      _
    $region3: #{tpu_custom_call.1} parent=1 // pred_check_branch
      %14 = sbr.rel (0) target = $region5
    $region4: #{tpu_custom_call.1} parent=1 // pred_region
      %s16 = ssub.s32 512, 512
      %17 = vsyncadd [#allocation4], %s16
      %s18 = sshll.u32 [#allocation3], 4
      %s19 = int_to_ptr.vmem [resolvable:$true] %s18
      %24 = dma.hbm_to_vmem [thread:$0]  %s0, 512, %s19, [#allocation4], 256, 256, 16
    $region5: #{tpu_custom_call.1} parent=1 // pred_fallthru
      _
    // Predicated region
    $region6: #{tpu_custom_call.1} parent=1 // pred_check
      _
    $region7: #{tpu_custom_call.1} parent=1 // pred_check_branch
      %26 = sbr.rel (0) target = $region9
    $region8: #{tpu_custom_call.1} parent=1 // pred_region
      %s28 = ssub.s32 512, 512
      %29 = vsyncadd [#allocation7], %s28
      %s30 = sshll.u32 [#allocation6], 4
      %s31 = int_to_ptr.vmem [resolvable:$true] %s30
      %36 = dma.hbm_to_vmem [thread:$0]  %s1, 512, %s31, [#allocation7], 256, 256, 16
    $region9: #{tpu_custom_call.1} parent=1 // pred_fallthru
      _
    // Predicated region
    $region10: #{tpu_custom_call.1} parent=1 // pred_check
      _
    $region11: #{tpu_custom_call.1} parent=1 // pred_check_branch
      %38 = sbr.rel (0) target = $region13
    $region12: #{tpu_custom_call.1} parent=1 // pred_region
      %s40 = ssub.s32 256, 256
      %41 = vsyncadd [#allocation7], %s40
      %s43 = sshll.u32 [#allocation8], 4
      %s44 = int_to_ptr.vmem [resolvable:$true] %s43
      %46 = dma.hbm_to_vmem [thread:$0]  %s2, 256, %s44, [#allocation7]
    $region13: #{tpu_custom_call.1} parent=1 // pred_fallthru
      _
    // Predicated region
    $region14: #{tpu_custom_call.1} parent=1 // pred_check
      _
    $region15: #{tpu_custom_call.1} parent=1 // pred_check_branch
      %48 = sbr.rel (0) target = $region17
    $region16: #{tpu_custom_call.1} parent=1 // pred_region
      %s50 = ssub.s32 256, 256
      %51 = vsyncadd [#allocation10], %s50
      %s53 = sshll.u32 [#allocation9], 4
      %s54 = int_to_ptr.vmem [resolvable:$true] %s53
      %56 = dma.hbm_to_vmem [thread:$0]  %s3, 256, %s54, [#allocation10]
    $region17: #{tpu_custom_call.1} parent=1 // pred_fallthru
      _
    // Predicated region
    $region18: #{tpu_custom_call.1} parent=1 // pred_check
      _
    $region19: #{tpu_custom_call.1} parent=1 // pred_check_branch
      %58 = sbr.rel (0) target = $region21
    $region20: #{tpu_custom_call.1} parent=1 // pred_region
      %59 = dma.done [#allocation4], 512
    $region21: #{tpu_custom_call.1} parent=1 // pred_fallthru
      _
    // Predicated region
    $region22: #{tpu_custom_call.1} parent=1 // pred_check
      _
    $region23: #{tpu_custom_call.1} parent=1 // pred_check_branch
      %61 = sbr.rel (0) target = $region25
    $region24: #{tpu_custom_call.1} parent=1 // pred_region
      %62 = dma.done [#allocation7], 512
    $region25: #{tpu_custom_call.1} parent=1 // pred_fallthru
      _
    // Predicated region
    $region26: #{tpu_custom_call.1} parent=1 // pred_check
      _
    $region27: #{tpu_custom_call.1} parent=1 // pred_check_branch
      %64 = sbr.rel (0) target = $region29
    $region28: #{tpu_custom_call.1} parent=1 // pred_region
      %65 = dma.done [#allocation7], 256
    $region29: #{tpu_custom_call.1} parent=1 // pred_fallthru
      _
    // Predicated region
    $region30: #{tpu_custom_call.1} parent=1 // pred_check
      _
    $region31: #{tpu_custom_call.1} parent=1 // pred_check_branch
      %67 = sbr.rel (0) target = $region33
    $region32: #{tpu_custom_call.1} parent=1 // pred_region
      %68 = dma.done [#allocation10], 256
    $region33: #{tpu_custom_call.1} parent=1 // pred_fallthru
      _
    %p69 = scmp.eq.s32.totalorder 0, 0
    // Predicated region
    $region34: #{tpu_custom_call.1} parent=1 // pred_check
      %p70 = pneg %p69
    $region35: #{tpu_custom_call.1} parent=1 // pred_check_branch
      %72 = sbr.rel (%p70) target = $region37
    $region36: #{tpu_custom_call.1} parent=1 // pred_region
      %v73 = vld [vmem:[#allocation9] sm:$0xff]
      %v74 = vld [vmem:[#allocation9 + $0x8] sm:$0xff]
      %vm75 = vcmp.ge.u32.totalorder %v73, 429496730
      %vm76 = vcmp.ge.u32.totalorder %v74, 429496730
      %v77 = vld [vmem:[#allocation8] sm:$0xff]
      %v78 = vld [vmem:[#allocation8 + $0x8] sm:$0xff]
      %v79 = vmul.f32 %v77, 1.1111112
      %v80 = vmul.f32 %v78, 1.1111112
      %v81 = vsel %vm75, %v79, 0.0
      %v82 = vsel %vm76, %v80, 0.0
      %83 = vst [vmem:[#allocation2] sm:$0xff] %v81
      %84 = vst [vmem:[#allocation2 + $0x8] sm:$0xff] %v82
    $region37: #{tpu_custom_call.1} parent=1 // pred_fallthru
      _
    %v85 = vld [vmem:[#allocation6] sm:$0xff]
    %v86 = vld [vmem:[#allocation6 + $0x8] sm:$0xff]
    %v87 = vld [vmem:[#allocation6 + $0x10] sm:$0xff]
    %v88 = vld [vmem:[#allocation6 + $0x18] sm:$0xff]
    %vm89 = vcmp.ge.u32.totalorder %v85, 429496730
    %vm90 = vcmp.ge.u32.totalorder %v86, 429496730
    %vm91 = vcmp.ge.u32.totalorder %v87, 429496730
    %vm92 = vcmp.ge.u32.totalorder %v88, 429496730
    %v93 = vld [vmem:[#allocation3] sm:$0xff]
    %v94 = vld [vmem:[#allocation3 + $0x8] sm:$0xff]
    %v95 = vld [vmem:[#allocation3 + $0x10] sm:$0xff]
    %v96 = vld [vmem:[#allocation3 + $0x18] sm:$0xff]
    %v97 = vmul.f32 %v93, 1.1111112
    %v98 = vmul.f32 %v94, 1.1111112
    %v99 = vmul.f32 %v95, 1.1111112
    %v100 = vmul.f32 %v96, 1.1111112
    %v101 = vsel %vm89, %v97, 0.0
    %v102 = vsel %vm90, %v98, 0.0
    %v103 = vsel %vm91, %v99, 0.0
    %v104 = vsel %vm92, %v100, 0.0
    %v105 = vld [vmem:[#allocation2] sm:$0xff]
    %v106 = vld [vmem:[#allocation2 + $0x8] sm:$0xff]
    %v107 = vadd.f32 %v101, %v105
    %v108 = vadd.f32 %v102, %v106
    %v109 = vadd.f32 %v103, %v105
    %v110 = vadd.f32 %v104, %v106
    %111 = vst [vmem:[#allocation11] sm:$0xff] %v107
    %112 = vst [vmem:[#allocation11 + $0x8] sm:$0xff] %v108
    %113 = vst [vmem:[#allocation11 + $0x10] sm:$0xff] %v109
    %114 = vst [vmem:[#allocation11 + $0x18] sm:$0xff] %v110
    // Predicated region
    $region38: #{tpu_custom_call.1} parent=1 // pred_check
      _
    $region39: #{tpu_custom_call.1} parent=1 // pred_check_branch
      %116 = sbr.rel (0) target = $region41
    $region40: #{tpu_custom_call.1} parent=1 // pred_region
      %s118 = ssub.s32 512, 512
      %119 = vsyncadd [#allocation5], %s118
      %s120 = sshll.u32 [#allocation11], 4
      %s121 = int_to_ptr.vmem [resolvable:$true] %s120
      %126 = dma.vmem_to_hbm [thread:$0]  %s121, 512, %s4, [#allocation5], 256, 256, 16
    $region41: #{tpu_custom_call.1} parent=1 // pred_fallthru
      _
    // Predicated region
    $region42: #{tpu_custom_call.1} parent=1 // pred_check
      _
    $region43: #{tpu_custom_call.1} parent=1 // pred_check_branch
      %128 = sbr.rel (0) target = $region45
    $region44: #{tpu_custom_call.1} parent=1 // pred_region
      %129 = dma.done [#allocation5], 512
    $region45: #{tpu_custom_call.1} parent=1 // pred_fallthru
      _
    %130 = vsyncpa [#allocation4], 1
    %131 = vsyncpa [#allocation7], 1
    %132 = vsyncpa [#allocation10], 1
    %133 = vsyncpa [#allocation5], 1

</llo_original>
